<compile_context>
chip_gen: v6e
topology: v6e:2x2x1
jax: 0.10.0
libtpu: 0.0.40
codegen_flags: <defaults>
</compile_context>

<pallas_src>
import functools

import numpy as np
import jax
import jax.numpy as jnp
from jax import lax
from jax.experimental import pallas as pl
from jax.experimental.pallas import tpu as pltpu

LN_EPS = 1e-5  # nn.LayerNorm default


# ---------------------------------------------------------------------------
# Hardware queries (with safe fallbacks)
# ---------------------------------------------------------------------------
def _tpu_vmem_bytes():
    try:
        return int(pltpu.get_tpu_info().vmem_capacity_bytes)
    except Exception:
        return 64 * 1024 * 1024          # conservative: v7x per-core VMEM


_ROLL_LIKE_JNP = None


def _roll_matches_jnp():
    """Probe pltpu.roll's rotation convention once (cached, interpret fallback)."""
    global _ROLL_LIKE_JNP
    if _ROLL_LIKE_JNP is None:
        def probe(x_ref, o_ref):
            o_ref[...] = pltpu.roll(x_ref[...], 1, axis=0)

        xp_np = np.arange(8 * 128, dtype=np.float32).reshape(8, 128)
        call = pl.pallas_call(
            probe, out_shape=jax.ShapeDtypeStruct((8, 128), jnp.float32))
        try:
            y = call(jnp.asarray(xp_np))
        except Exception:
            with pltpu.force_tpu_interpret_mode():
                y = call(jnp.asarray(xp_np))
        _ROLL_LIKE_JNP = bool(
            np.array_equal(np.asarray(y), np.roll(xp_np, 1, axis=0)))
    return _ROLL_LIKE_JNP


# ---------------------------------------------------------------------------
# Fused VariancePredictor x3 kernel (row-gridded)
# ---------------------------------------------------------------------------
def _layer_norm(h, gamma, beta):
    """Two-pass LayerNorm over the lane (channel) axis, f32."""
    mu = jnp.mean(h, axis=-1, keepdims=True)
    c = h - mu
    var = jnp.mean(c * c, axis=-1, keepdims=True)
    return c * lax.rsqrt(var + LN_EPS) * gamma + beta


def _tap(h, shift, valid_cols, roll_like_jnp):
    """bf16 copy of h with tap[i] = h[i + shift], zeroed outside each sequence."""
    if shift == 0:
        return h.astype(jnp.bfloat16)
    n = h.shape[0]
    amount = (-shift) % n if roll_like_jnp else shift % n
    rolled = pltpu.roll(h, amount, axis=0)            # XLU sublane rotate
    # zeroing folded into the cast via a hoisted 0/1 column (VPU mul, no select)
    return (rolled * valid_cols[shift]).astype(jnp.bfloat16)


def _concat_taps(h, shifts, valid_cols, roll_like_jnp):
    """(n, len(shifts)*C) bf16 taps concatenated along the MXU contraction axis."""
    return jnp.concatenate(
        [_tap(h, s, valid_cols, roll_like_jnp) for s in shifts], axis=-1)


def _vp_tail(h1_raw, w2_ref, tab, shifts2, valid_cols, roll_like_jnp, keep):
    """bias+ReLU+LN -> conv2 (one matmul) -> bias+ReLU+LN -> linear(F->1) -> mask."""
    h1 = _layer_norm(jnp.maximum(h1_raw + tab[0:1, :], 0.0), tab[1:2, :], tab[2:3, :])
    taps2 = _concat_taps(h1, shifts2, valid_cols, roll_like_jnp)      # (n, K*F)
    h2_raw = jnp.dot(taps2, w2_ref[...], preferred_element_type=jnp.float32)
    h2 = _layer_norm(jnp.maximum(h2_raw + tab[3:4, :], 0.0), tab[4:5, :], tab[5:6, :])
    # F -> 1 linear as a VPU multiply + lane reduction (MXU with N=1 is wasteful).
    pred = jnp.sum(h2 * tab[6:7, :], axis=-1, keepdims=True) + tab[7:8, 0:1]
    return pred * keep                                # masked_fill(mask, 0.0)


def _fused_vp_kernel(x_ref, pemb_ref, eemb_ref, mask_ref,
                     w1d_ref, w2d_ref, tabd_ref,
                     w1pe_ref, w2p_ref, tabp_ref, w2e_ref, tabe_ref,
                     pred_ref, x2_ref,
                     *, seq_len, kernel_size, filter_size, roll_like_jnp):
    k = kernel_size
    pad1 = (k - 1) // 2
    shifts1 = tuple(range(-pad1, k - pad1))           # conv1 taps
    shifts2 = tuple(range(-1, k - 1))                 # conv2 taps (padding=1)

    x = x_ref[...]                                    # (n, H) f32
    x2 = x + pemb_ref[...] + eemb_ref[...]            # fused embedding adds
    x2_ref[...] = x2.astype(jnp.bfloat16)             # bf16 hand-off to LengthRegulator

    n = x.shape[0]
    # block rows are whole sequences -> local row -> time index is grid-invariant
    row_t = lax.broadcasted_iota(jnp.int32, (n, 1), 0) % seq_len
    keep = 1.0 - mask_ref[...]                        # (n, 1): 1.0 on valid positions

    # hoist 0/1 shift-validity columns once; reused by every tap below
    valid_cols = {}
    for s in sorted(set(shifts1) | set(shifts2)):
        if s != 0:
            valid_cols[s] = jnp.logical_and(
                row_t + s >= 0, row_t + s < seq_len).astype(jnp.float32)

    x_taps = _concat_taps(x, shifts1, valid_cols, roll_like_jnp)      # (n, K*H) bf16
    x2_taps = _concat_taps(x2, shifts1, valid_cols, roll_like_jnp)    # shared pitch+energy

    # duration predictor (input x)
    h1d = jnp.dot(x_taps, w1d_ref[...], preferred_element_type=jnp.float32)
    dur = _vp_tail(h1d, w2d_ref, tabd_ref[...], shifts2, valid_cols,
                   roll_like_jnp, keep)

    # pitch + energy conv1 merged into a single (n, K*H) @ (K*H, 2F) matmul
    h1pe = jnp.dot(x2_taps, w1pe_ref[...], preferred_element_type=jnp.float32)
    f = filter_size
    pit = _vp_tail(h1pe[:, :f], w2p_ref, tabp_ref[...], shifts2, valid_cols,
                   roll_like_jnp, keep)
    ene = _vp_tail(h1pe[:, f:], w2e_ref, tabe_ref[...], shifts2, valid_cols,
                   roll_like_jnp, keep)

    # lane-dense packed predictions: lane 0 = log-duration, 1 = pitch, 2 = energy
    pred_ref[...] = jnp.zeros_like(pred_ref)
    pred_ref[:, 0:1] = dur
    pred_ref[:, 1:2] = pit
    pred_ref[:, 2:3] = ene


def _choose_seqs_per_block(n_seq, seq_len, hidden, filt, ksize, budget_bytes):
    """Largest whole-sequence row block that fits the VMEM budget."""
    bytes_per_row = (4 * (6 * hidden + 6 * filt + 128 + 16)
                     + 2 * (2 * ksize * hidden + 3 * ksize * filt + hidden))
    bytes_per_row *= 2                                # double buffering + slack
    rows = max(seq_len, budget_bytes // max(bytes_per_row, 1))
    spb = max(1, min(n_seq, rows // seq_len))

    def ok(s):
        # whole-sequence blocks, evenly dividing the batch, sublane-aligned rows
        return s == n_seq or (n_seq % s == 0 and (s * seq_len) % 16 == 0)

    while spb > 1 and not ok(spb):
        spb -= 1
    if not ok(spb):
        spb = n_seq
    return spb


def fused_variance_predictors(x, pitch_emb, energy_emb, src_mask, params, kernel_size):
    """One row-tiled pallas_call: log-duration / pitch / energy predictions + bf16 x2."""
    B, T, H = x.shape
    K = kernel_size
    F = params["duration"]["conv2_w"].shape[-1]
    N = B * T

    xf = x.reshape(N, H)
    pf = pitch_emb.reshape(N, H)
    ef = energy_emb.reshape(N, H)
    maskf = src_mask.astype(jnp.float32).reshape(N, 1)

    # weights laid out for the concatenated-contraction matmuls
    w1d = params["duration"]["conv1_w"].reshape(K * H, F).astype(jnp.bfloat16)
    w2d = params["duration"]["conv2_w"].reshape(K * F, F).astype(jnp.bfloat16)
    w1pe = jnp.concatenate(
        [params["pitch"]["conv1_w"].reshape(K * H, F),
         params["energy"]["conv1_w"].reshape(K * H, F)],
        axis=-1).astype(jnp.bfloat16)                 # (K*H, 2F)
    w2p = params["pitch"]["conv2_w"].reshape(K * F, F).astype(jnp.bfloat16)
    w2e = params["energy"]["conv2_w"].reshape(K * F, F).astype(jnp.bfloat16)
    tabd = params["duration"]["tab"]
    tabp = params["pitch"]["tab"]
    tabe = params["energy"]["tab"]

    vmem = _tpu_vmem_bytes()
    vmem_limit = max(32 << 20, min(vmem * 3 // 4, 100 << 20))
    spb = _choose_seqs_per_block(B, T, H, F, K, vmem_limit // 2)
    block_rows = spb * T
    grid = (B // spb,)

    row_spec = lambda last: pl.BlockSpec((block_rows, last), lambda r: (r, 0))
    full2 = lambda a, b: pl.BlockSpec((a, b), lambda r: (0, 0))

    pred_packed, x2 = pl.pallas_call(
        functools.partial(_fused_vp_kernel, seq_len=T, kernel_size=K,
                          filter_size=F, roll_like_jnp=_roll_matches_jnp()),
        grid=grid,
        in_specs=[
            row_spec(H), row_spec(H), row_spec(H), row_spec(1),
            full2(K * H, F), full2(K * F, F), full2(8, F),
            full2(K * H, 2 * F), full2(K * F, F), full2(8, F),
            full2(K * F, F), full2(8, F),
        ],
        out_specs=(row_spec(128), row_spec(H)),
        out_shape=(
            jax.ShapeDtypeStruct((N, 128), jnp.float32),   # packed predictions
            jax.ShapeDtypeStruct((N, H), jnp.bfloat16),    # x + p_emb + e_emb
        ),
        compiler_params=pltpu.CompilerParams(
            dimension_semantics=("parallel",),
            vmem_limit_bytes=vmem_limit),
    )(xf, pf, ef, maskf, w1d, w2d, tabd, w1pe, w2p, tabp, w2e, tabe)

    dur = pred_packed[:, 0].reshape(B, T)
    pit = pred_packed[:, 1].reshape(B, T)
    ene = pred_packed[:, 2].reshape(B, T)
    return dur, pit, ene, x2.reshape(B, T, H)


# ---------------------------------------------------------------------------
# LengthRegulator kernel
# ---------------------------------------------------------------------------
def _length_regulator_kernel(x_ref, start_ref, dur_ref, out_ref, *, ml_tile):
    x = x_ref[0]                                      # (T, H) bf16 (no per-step cast)
    start = start_ref[0]                              # (1, T) int32 exclusive cumsum
    dur = dur_ref[0]                                  # (1, T) int32
    T = x.shape[0]
    r0 = pl.program_id(1) * ml_tile
    frame = lax.broadcasted_iota(jnp.int32, (ml_tile, T), 0) + r0
    # one unsigned compare: frame in [start, start+dur)  <=>  (frame-start) u< dur
    sel = (frame - start).astype(jnp.uint32) < dur.astype(jnp.uint32)
    # 0/1 selection matrix is exact in bf16 -> bf16 MXU matmul, f32 accumulation
    out_ref[0] = jnp.dot(sel.astype(jnp.bfloat16), x,
                         preferred_element_type=jnp.float32)


def length_regulator(x_bf16, duration, max_len):
    """LengthRegulator.forward with known duration_target and max_len."""
    B, T, H = x_bf16.shape
    dur = duration.astype(jnp.int32)
    cum = jnp.cumsum(dur, axis=1)                     # tiny XLA glue
    start3 = (cum - dur).reshape(B, 1, T)
    dur3 = dur.reshape(B, 1, T)

    vmem = _tpu_vmem_bytes()
    cap = 2048 if vmem >= (100 << 20) else 512        # big tiles on 128 MiB parts, 512 on v7x
    ml_tile = max_len if max_len <= cap else cap
    n_ml = pl.cdiv(max_len, ml_tile)

    out = pl.pallas_call(
        functools.partial(_length_regulator_kernel, ml_tile=ml_tile),
        out_shape=jax.ShapeDtypeStruct((B, max_len, H), jnp.float32),
        grid=(B, n_ml),
        in_specs=[
            pl.BlockSpec((1, T, H), lambda b, m: (b, 0, 0)),
            pl.BlockSpec((1, 1, T), lambda b, m: (b, 0, 0)),
            pl.BlockSpec((1, 1, T), lambda b, m: (b, 0, 0)),
        ],
        out_specs=pl.BlockSpec((1, ml_tile, H), lambda b, m: (b, m, 0)),
        compiler_params=pltpu.CompilerParams(
            dimension_semantics=("parallel", "parallel")),
    )(x_bf16, start3, dur3)

    mel_len = jnp.sum(dur, axis=1).astype(jnp.int32)  # matches torch (unclamped)
    return out, mel_len


# ---------------------------------------------------------------------------
# VarianceAdaptor.forward (teacher-forced duration path)
# ---------------------------------------------------------------------------
def variance_adaptor_forward(params, x, src_mask, mel_mask=None, max_len=None,
                             duration_target=None, pitch_embedding=None,
                             energy_embedding=None, kernel_size=3):
    log_duration_prediction, pitch_prediction, energy_prediction, x2 = \
        fused_variance_predictors(x, pitch_embedding, energy_embedding,
                                  src_mask, params, kernel_size)
    # TODO(synk): predicted-duration branch (round(exp(d)-1) + get_mask_from_lengths
    # with data-dependent max(mel_len)) needs dynamic shapes; only the
    # duration_target (teacher-forced) path is implemented.
    x_exp, mel_len = length_regulator(x2, duration_target, max_len)
    duration_rounded = duration_target
    return (x_exp, pitch_prediction, energy_prediction, log_duration_prediction,
            duration_rounded, mel_len, mel_mask)


# ---------------------------------------------------------------------------
# Parameter construction (PyTorch-like init, packed layout)
# ---------------------------------------------------------------------------
def init_vp_params(key, H, F, K):
    ks = jax.random.split(key, 6)

    def u(kk, shape, fan_in):
        bound = 1.0 / np.sqrt(fan_in)
        return jax.random.uniform(kk, shape, jnp.float32, -bound, bound)

    conv1_w = u(ks[0], (K, H, F), H * K)   # == torch conv1.weight[:, :, k].T per tap
    conv1_b = u(ks[1], (F,), H * K)
    conv2_w = u(ks[2], (K, F, F), F * K)
    conv2_b = u(ks[3], (F,), F * K)
    lin_w = u(ks[4], (F,), F)
    lin_b = u(ks[5], (), F)
    # Packed small-parameter table: rows = [b1, g1, be1, b2, g2, be2, lin_w, lin_b].
    tab = jnp.stack([
        conv1_b, jnp.ones((F,), jnp.float32), jnp.zeros((F,), jnp.float32),
        conv2_b, jnp.ones((F,), jnp.float32), jnp.zeros((F,), jnp.float32),
        lin_w, jnp.full((F,), lin_b),
    ], axis=0).astype(jnp.float32)
    return {"conv1_w": conv1_w, "conv2_w": conv2_w, "tab": tab}


# ---------------------------------------------------------------------------
# Pure-JAX reference (emulates the same bf16 operand casts) for validation
# ---------------------------------------------------------------------------
def _ref_variance_predictor(x, mask, p, K):
    w1 = p["conv1_w"].astype(jnp.bfloat16).astype(jnp.float32)
    w2 = p["conv2_w"].astype(jnp.bfloat16).astype(jnp.float32)
    tab = p["tab"]
    b1, g1, be1 = tab[0], tab[1], tab[2]
    b2, g2, be2 = tab[3], tab[4], tab[5]
    lw, lb = tab[6], tab[7, 0]

    def shift_t(h, s):
        B, T, C = h.shape
        if s == 0:
            return h
        z = jnp.zeros((B, abs(s), C), h.dtype)
        if s > 0:
            return jnp.concatenate([h[:, s:], z], axis=1)
        return jnp.concatenate([z, h[:, :T + s]], axis=1)

    def conv(h, w, padn):
        acc = 0.0
        for k in range(w.shape[0]):
            hs = shift_t(h, k - padn).astype(jnp.bfloat16).astype(jnp.float32)
            acc = acc + jnp.einsum("btc,cf->btf", hs, w[k])
        return acc

    def ln(h, g, b):
        mu = jnp.mean(h, axis=-1, keepdims=True)
        var = jnp.mean((h - mu) ** 2, axis=-1, keepdims=True)
        return (h - mu) * lax.rsqrt(var + LN_EPS) * g + b

    h = ln(jax.nn.relu(conv(x, w1, (K - 1) // 2) + b1), g1, be1)
    h = ln(jax.nn.relu(conv(h, w2, 1) + b2), g2, be2)
    out = jnp.einsum("btf,f->bt", h, lw) + lb
    return jnp.where(mask, 0.0, out)


def _ref_length_regulator(x2, duration, max_len):
    dur = duration.astype(jnp.int32)
    cum = jnp.cumsum(dur, axis=1)
    start = cum - dur
    frames = jnp.arange(max_len, dtype=jnp.int32)[None, :, None]
    sel = ((frames >= start[:, None, :]) & (frames < cum[:, None, :])).astype(jnp.float32)
    xb = x2.astype(jnp.bfloat16).astype(jnp.float32)
    return jnp.einsum("bmt,bth->bmh", sel, xb), jnp.sum(dur, axis=1)


def _ref_forward(params, x, src_mask, duration, max_len, p_emb, e_emb, K):
    log_d = _ref_variance_predictor(x, src_mask, params["duration"], K)
    x2 = x + p_emb + e_emb
    pit = _ref_variance_predictor(x2, src_mask, params["pitch"], K)
    ene = _ref_variance_predictor(x2, src_mask, params["energy"], K)
    x_exp, mel_len = _ref_length_regulator(x2, duration, max_len)
    return x_exp, pit, ene, log_d, mel_len


# ---------------------------------------------------------------------------
if __name__ == "__main__":
    B, T, H = 2, 8, 32          # batch, phoneme seq len, encoder_hidden
    F_SIZE, K = 32, 3           # variance_predictor filter_size, kernel_size
    MAX_LEN = 24                # mel frame max length (given)

    key = jax.random.PRNGKey(0)
    kx, kp, ke, kd, k1, k2, k3 = jax.random.split(key, 7)

    x = jax.random.normal(kx, (B, T, H), jnp.float32)
    pitch_embedding = 0.1 * jax.random.normal(kp, (B, T, H), jnp.float32)
    energy_embedding = 0.1 * jax.random.normal(ke, (B, T, H), jnp.float32)

    src_lens = jnp.array([T, T - 2], jnp.int32)
    ids = jnp.arange(T)[None, :]
    src_mask = ids >= src_lens[:, None]            # True where padded

    duration_target = jax.random.randint(kd, (B, T), 0, 4).astype(jnp.int32)
    duration_target = jnp.where(src_mask, 0, duration_target)

    params = {
        "duration": init_vp_params(k1, H, F_SIZE, K),
        "pitch": init_vp_params(k2, H, F_SIZE, K),
        "energy": init_vp_params(k3, H, F_SIZE, K),
    }

    outs = variance_adaptor_forward(
        params, x, src_mask, mel_mask=None, max_len=MAX_LEN,
        duration_target=duration_target,
        pitch_embedding=pitch_embedding, energy_embedding=energy_embedding,
        kernel_size=K)

    x_exp, p_pred, e_pred, log_d, dur_r, mel_len, mel_mask = outs
    jax.block_until_ready((x_exp, p_pred, e_pred, log_d, dur_r, mel_len))

    assert x_exp.shape == (B, MAX_LEN, H)
    assert p_pred.shape == (B, T) and e_pred.shape == (B, T) and log_d.shape == (B, T)

    # Validate against a pure-JAX reference (same bf16 operand rounding points).
    ref_x_exp, ref_p, ref_e, ref_d, ref_mel = _ref_forward(
        params, x, src_mask, duration_target, MAX_LEN,
        pitch_embedding, energy_embedding, K)
    np.testing.assert_allclose(np.asarray(log_d), np.asarray(ref_d), rtol=1e-2, atol=1e-2)
    np.testing.assert_allclose(np.asarray(p_pred), np.asarray(ref_p), rtol=1e-2, atol=1e-2)
    np.testing.assert_allclose(np.asarray(e_pred), np.asarray(ref_e), rtol=1e-2, atol=1e-2)
    np.testing.assert_allclose(np.asarray(x_exp), np.asarray(ref_x_exp), rtol=1e-4, atol=1e-4)
    np.testing.assert_array_equal(np.asarray(mel_len), np.asarray(ref_mel))

    print("KERNEL_OK")
</pallas_src>

<mosaic_0001>
module attributes {stable_mosaic.version = 11 : i64} {
  func.func @probe(%arg0: memref<8x128xf32, #tpu.memory_space<vmem>>, %arg1: memref<8x128xf32, #tpu.memory_space<vmem>>) attributes {dimension_semantics = [], scalar_prefetch = 0 : i64, scratch_operands = 0 : i64, tpu.core_type = #tpu.core_type<tc>} {
    %c0 = arith.constant 0 : index
    %c0_0 = arith.constant 0 : index
    %0 = vector.load %arg0[%c0, %c0_0] : memref<8x128xf32, #tpu.memory_space<vmem>>, vector<8x128xf32>
    %c1_i32 = arith.constant 1 : i32
    %1 = tpu.dynamic_rotate %0 by %c1_i32 dim 0 : vector<8x128xf32>, i32 -> vector<8x128xf32>
    %c0_1 = arith.constant 0 : index
    %c0_2 = arith.constant 0 : index
    %2 = vector.load %arg1[%c0_1, %c0_2] : memref<8x128xf32, #tpu.memory_space<vmem>>, vector<8x128xf32>
    tpu.vector_store %arg1[%c0_1, %c0_2], %1 {strides = array<i32>} : memref<8x128xf32, #tpu.memory_space<vmem>>, vector<8x128xf32>,
    return
  }
}

module attributes {stable_mosaic.version = 11 : i64} {
  func.func @probe(%arg0: memref<8x128xf32, #tpu.memory_space<vmem>>, %arg1: memref<8x128xf32, #tpu.memory_space<vmem>>) attributes {dimension_semantics = [], scalar_prefetch = 0 : i64, scratch_operands = 0 : i64, tpu.core_type = #tpu.core_type<tc>} {
    %c0 = arith.constant 0 : index
    %c0_0 = arith.constant 0 : index
    %0 = vector.load %arg0[%c0, %c0_0] : memref<8x128xf32, #tpu.memory_space<vmem>>, vector<8x128xf32>
    %c1_i32 = arith.constant 1 : i32
    %1 = tpu.dynamic_rotate %0 by %c1_i32 dim 0 : vector<8x128xf32>, i32 -> vector<8x128xf32>
    %c0_1 = arith.constant 0 : index
    %c0_2 = arith.constant 0 : index
    %2 = vector.load %arg1[%c0_1, %c0_2] : memref<8x128xf32, #tpu.memory_space<vmem>>, vector<8x128xf32>
    tpu.vector_store %arg1[%c0_1, %c0_2], %1 {strides = array<i32>} : memref<8x128xf32, #tpu.memory_space<vmem>>, vector<8x128xf32>,
    return
  }
}

</mosaic_0001>

<llo_original>
// kernel: tpu_custom_call.1
$region0: #{tpu_custom_call.1}
  #allocation0 [shape = 'u32[]', space=smem, size = 0x4, offset = 0x4, fixed_abs, tag = 'smem constant byte address 0x4 - core index']
  #allocation1 [shape = 'u32[144,128]{1,0:T(1,128)}', space=vmem, size = 0x12000, scoped, tag = 'internal scratch']
  %s0 = inlined_call_operand.hbm [shape: f32[8,128], index: 0, kind: input, shape index: {}]
  %s1 = inlined_call_operand.hbm [shape: f32[8,128], index: 1, kind: output, shape index: {}]
  %s2 = sld [smem:[#allocation0]]
  $region18: #{tpu_custom_call.1} parent=0
    _
  %s4 = ssub.s32 1, %s2
  %s5 = scalar_select 0, %s4, %s2
  $region1: #{tpu_custom_call.1} parent=0
    #allocation2 [shape = 'u8[4096]{0}', space=vmem, size = 0x1000, scoped, tag = 'input window, operand 0, single buffered']
    #allocation3 [shape = 's32[1]{0}', space=sflag, size = 0x4, scoped, tag = 'scoped memory for tpu_custom_call.1']
    #allocation4 [shape = 's32[1]{0}', space=sflag, size = 0x4, scoped, tag = 'scoped memory for tpu_custom_call.1']
    #allocation5 [shape = 'u8[4096]{0}', space=vmem, size = 0x1000, scoped, tag = 'output window, operand 0, single buffered']
    %6 = vsyncpa [#allocation3], 0
    %7 = vsyncpa [#allocation4], 0
    // Predicated region
    $region2: #{tpu_custom_call.1} parent=1 // pred_check
      _
    $region3: #{tpu_custom_call.1} parent=1 // pred_check_branch
      %9 = sbr.rel (0) target = $region5
    $region4: #{tpu_custom_call.1} parent=1 // pred_region
      %s11 = ssub.s32 128, 128
      %12 = vsyncadd [#allocation3], %s11
      %s14 = sshll.u32 [#allocation2], 4
      %s15 = int_to_ptr.vmem [resolvable:$true] %s14
      %17 = dma.hbm_to_vmem [thread:$0]  %s0, 128, %s15, [#allocation3]
    $region5: #{tpu_custom_call.1} parent=1 // pred_fallthru
      _
    // Predicated region
    $region6: #{tpu_custom_call.1} parent=1 // pred_check
      _
    $region7: #{tpu_custom_call.1} parent=1 // pred_check_branch
      %19 = sbr.rel (0) target = $region9
    $region8: #{tpu_custom_call.1} parent=1 // pred_region
      %20 = dma.done [#allocation3], 128
    $region9: #{tpu_custom_call.1} parent=1 // pred_fallthru
      _
    %v21 = vld [vmem:[#allocation2] sm:$0xff]
    %v22 = vrot.slane %v21, 7
    %23 = vst [vmem:[#allocation5] sm:$0xff] %v22
    // Predicated region
    $region10: #{tpu_custom_call.1} parent=1 // pred_check
      _
    $region11: #{tpu_custom_call.1} parent=1 // pred_check_branch
      %25 = sbr.rel (0) target = $region13
    $region12: #{tpu_custom_call.1} parent=1 // pred_region
      %s27 = ssub.s32 128, 128
      %28 = vsyncadd [#allocation4], %s27
      %s30 = sshll.u32 [#allocation5], 4
      %s31 = int_to_ptr.vmem [resolvable:$true] %s30
      %33 = dma.vmem_to_hbm [thread:$0]  %s31, 128, %s1, [#allocation4]
    $region13: #{tpu_custom_call.1} parent=1 // pred_fallthru
      _
    // Predicated region
    $region14: #{tpu_custom_call.1} parent=1 // pred_check
      _
    $region15: #{tpu_custom_call.1} parent=1 // pred_check_branch
      %35 = sbr.rel (0) target = $region17
    $region16: #{tpu_custom_call.1} parent=1 // pred_region
      %36 = dma.done [#allocation4], 128
    $region17: #{tpu_custom_call.1} parent=1 // pred_fallthru
      _
    %37 = vsyncpa [#allocation3], 1
    %38 = vsyncpa [#allocation4], 1

// kernel: tpu_custom_call.1
$region0: #{tpu_custom_call.1}
  #allocation0 [shape = 'u32[]', space=smem, size = 0x4, offset = 0x4, fixed_abs, tag = 'smem constant byte address 0x4 - core index']
  #allocation1 [shape = 'u32[144,128]{1,0:T(1,128)}', space=vmem, size = 0x12000, scoped, tag = 'internal scratch']
  %s0 = inlined_call_operand.hbm [shape: f32[8,128], index: 0, kind: input, shape index: {}]
  %s1 = inlined_call_operand.hbm [shape: f32[8,128], index: 1, kind: output, shape index: {}]
  %s2 = sld [smem:[#allocation0]]
  $region18: #{tpu_custom_call.1} parent=0
    _
  %s4 = ssub.s32 1, %s2
  %s5 = scalar_select 0, %s4, %s2
  $region1: #{tpu_custom_call.1} parent=0
    #allocation2 [shape = 'u8[4096]{0}', space=vmem, size = 0x1000, scoped, tag = 'input window, operand 0, single buffered']
    #allocation3 [shape = 's32[1]{0}', space=sflag, size = 0x4, scoped, tag = 'scoped memory for tpu_custom_call.1']
    #allocation4 [shape = 's32[1]{0}', space=sflag, size = 0x4, scoped, tag = 'scoped memory for tpu_custom_call.1']
    #allocation5 [shape = 'u8[4096]{0}', space=vmem, size = 0x1000, scoped, tag = 'output window, operand 0, single buffered']
    %6 = vsyncpa [#allocation3], 0
    %7 = vsyncpa [#allocation4], 0
    // Predicated region
    $region2: #{tpu_custom_call.1} parent=1 // pred_check
      _
    $region3: #{tpu_custom_call.1} parent=1 // pred_check_branch
      %9 = sbr.rel (0) target = $region5
    $region4: #{tpu_custom_call.1} parent=1 // pred_region
      %s11 = ssub.s32 128, 128
      %12 = vsyncadd [#allocation3], %s11
      %s14 = sshll.u32 [#allocation2], 4
      %s15 = int_to_ptr.vmem [resolvable:$true] %s14
      %17 = dma.hbm_to_vmem [thread:$0]  %s0, 128, %s15, [#allocation3]
    $region5: #{tpu_custom_call.1} parent=1 // pred_fallthru
      _
    // Predicated region
    $region6: #{tpu_custom_call.1} parent=1 // pred_check
      _
    $region7: #{tpu_custom_call.1} parent=1 // pred_check_branch
      %19 = sbr.rel (0) target = $region9
    $region8: #{tpu_custom_call.1} parent=1 // pred_region
      %20 = dma.done [#allocation3], 128
    $region9: #{tpu_custom_call.1} parent=1 // pred_fallthru
      _
    %v21 = vld [vmem:[#allocation2] sm:$0xff]
    %v22 = vrot.slane %v21, 7
    %23 = vst [vmem:[#allocation5] sm:$0xff] %v22
    // Predicated region
    $region10: #{tpu_custom_call.1} parent=1 // pred_check
      _
    $region11: #{tpu_custom_call.1} parent=1 // pred_check_branch
      %25 = sbr.rel (0) target = $region13
    $region12: #{tpu_custom_call.1} parent=1 // pred_region
      %s27 = ssub.s32 128, 128
      %28 = vsyncadd [#allocation4], %s27
      %s30 = sshll.u32 [#allocation5], 4
      %s31 = int_to_ptr.vmem [resolvable:$true] %s30
      %33 = dma.vmem_to_hbm [thread:$0]  %s31, 128, %s1, [#allocation4]
    $region13: #{tpu_custom_call.1} parent=1 // pred_fallthru
      _
    // Predicated region
    $region14: #{tpu_custom_call.1} parent=1 // pred_check
      _
    $region15: #{tpu_custom_call.1} parent=1 // pred_check_branch
      %35 = sbr.rel (0) target = $region17
    $region16: #{tpu_custom_call.1} parent=1 // pred_region
      %36 = dma.done [#allocation4], 128
    $region17: #{tpu_custom_call.1} parent=1 // pred_fallthru
      _
    %37 = vsyncpa [#allocation3], 1
    %38 = vsyncpa [#allocation4], 1

</llo_original>
